<compile_context>
chip_gen: v5e
topology: v5e:2x2
jax: 0.10.0
libtpu: 0.0.40
codegen_flags: <defaults>
</compile_context>

<pallas_src>
import jax
import jax.numpy as jnp
import numpy as np
from jax.experimental import pallas as pl
from jax.experimental.pallas import tpu as pltpu


# --------------------------------------------------------------------------
# Kernels
# --------------------------------------------------------------------------
def _prop1_kernel(adj_ref, xk_ref, xi_ref, w1_ref, b1_ref, w2_ref, b2_ref,
                  z2_ref, acc_ref, deg_ref):
    """Accumulate (A+I) @ X over contraction tiles; at the last tile apply
    fc1 (with degree-scaled bias), relu, and fc2.  Emits Z2 = fc2(H1)."""
    k = pl.program_id(1)

    @pl.when(k == 0)
    def _init():
        # identity (self-loop) contribution of (A + I) @ X
        acc_ref[...] = xi_ref[...].astype(jnp.float32)
        deg_ref[...] = jnp.zeros_like(deg_ref)

    a = adj_ref[...]                                    # (tm, tk) bf16 tile
    acc_ref[...] += jnp.dot(a, xk_ref[...], preferred_element_type=jnp.float32)
    deg_ref[...] += jnp.sum(a.astype(jnp.float32), axis=1, keepdims=True)

    @pl.when(k == pl.num_programs(1) - 1)
    def _finalize():
        deg = deg_ref[...] + 1.0                        # rowsum(A) + 1 (identity)
        h1 = jnp.dot(acc_ref[...], w1_ref[...], preferred_element_type=jnp.float32)
        h1 = jnp.maximum(h1 + deg * b1_ref[...], 0.0)   # relu((A+I)(X W1 + b1))
        z2 = jnp.dot(h1, w2_ref[...], preferred_element_type=jnp.float32) + b2_ref[...]
        z2_ref[...] = z2.astype(z2_ref.dtype)


def _prop2_kernel(adj_ref, zk_ref, zi_ref, h2_ref, acc_ref):
    """H2 = relu((A+I) @ Z2), streamed over adj tiles."""
    k = pl.program_id(1)

    @pl.when(k == 0)
    def _init():
        acc_ref[...] = zi_ref[...].astype(jnp.float32)  # identity (self) term

    acc_ref[...] += jnp.dot(adj_ref[...], zk_ref[...],
                            preferred_element_type=jnp.float32)

    @pl.when(k == pl.num_programs(1) - 1)
    def _finalize():
        h2_ref[...] = jnp.maximum(acc_ref[...], 0.0).astype(h2_ref.dtype)


def _head_kernel(idx_ref, h_ref, w3_ref, b3_ref, w4_ref, b4_ref, out_ref):
    """scatter_add_ readout (one-hot matmul) + fc3 + relu + fc4 + log_softmax."""
    n_graphs = out_ref.shape[0]
    n_nodes = h_ref.shape[0]

    gids = jax.lax.broadcasted_iota(jnp.int32, (n_graphs, n_nodes), 0)
    pool = (gids == idx_ref[...]).astype(jnp.float32)   # idx_ref: (1, N), broadcasts
    pooled = jnp.dot(pool, h_ref[...], preferred_element_type=jnp.float32)

    z = jnp.dot(pooled, w3_ref[...], preferred_element_type=jnp.float32) + b3_ref[...]
    z = jnp.maximum(z, 0.0)
    logits = jnp.dot(z, w4_ref[...], preferred_element_type=jnp.float32) + b4_ref[...]

    m = jnp.max(logits, axis=1, keepdims=True)
    s = logits - m
    out_ref[...] = s - jnp.log(jnp.sum(jnp.exp(s), axis=1, keepdims=True))


# --------------------------------------------------------------------------
# Wrapper
# --------------------------------------------------------------------------
def _pick_tile(n):
    for t in (1024, 512, 256, 128):
        if n % t == 0:
            return t
    return n  # TODO(synk): pad N for non-tile-divisible graphs instead of one big block.


def gnn_forward(x, adj, idx, params, n_graphs):
    """x: (N, input_dim) f32, adj: (N, N) dense f32, idx: (N,) int32."""
    w1, b1, w2, b2, w3, b3, w4, b4 = params
    N, din = x.shape
    h1 = w1.shape[1]
    h2 = w2.shape[1]
    n_class = w4.shape[1]

    # bf16 stream for the O(N^2) propagation matmuls (f32 MXU accumulation).
    adj_bf = adj.astype(jnp.bfloat16)
    x_bf = x.astype(jnp.bfloat16)
    idx2d = idx.reshape(1, -1).astype(jnp.int32)

    tm = _pick_tile(N)
    tk = _pick_tile(N)
    grid = (N // tm, N // tk)

    cparams = pltpu.CompilerParams(
        dimension_semantics=("parallel", "arbitrary"),
        vmem_limit_bytes=32 * 1024 * 1024,   # explicit, safe on v5e/v6e/v7x
    )

    def full_spec(arr):
        nd = arr.ndim
        return pl.BlockSpec(arr.shape, lambda i, k, _nd=nd: (0,) * _nd)

    adj_spec = pl.BlockSpec((tm, tk), lambda i, k: (i, k))

    # ---- layer 1 (+ fused fc2): Z2 = fc2(relu((A+I) @ fc1(X))) --------------
    z2 = pl.pallas_call(
        _prop1_kernel,
        out_shape=jax.ShapeDtypeStruct((N, h2), jnp.bfloat16),
        grid=grid,
        in_specs=[
            adj_spec,
            pl.BlockSpec((tk, din), lambda i, k: (k, 0)),   # X, contraction tiles
            pl.BlockSpec((tm, din), lambda i, k: (i, 0)),   # X, self (row) tiles
            full_spec(w1), full_spec(b1), full_spec(w2), full_spec(b2),
        ],
        out_specs=pl.BlockSpec((tm, h2), lambda i, k: (i, 0)),
        scratch_shapes=[pltpu.VMEM((tm, din), jnp.float32),
                        pltpu.VMEM((tm, 1), jnp.float32)],
        compiler_params=cparams,
        cost_estimate=pl.CostEstimate(
            flops=2 * N * N * din + 2 * N * din * h1 + 2 * N * h1 * h2,
            transcendentals=0,
            bytes_accessed=2 * N * N + 4 * N * din + 2 * N * h2),
    )(adj_bf, x_bf, x_bf, w1, b1, w2, b2)

    # ---- layer 2: H2 = relu((A+I) @ Z2) -------------------------------------
    h2_nodes = pl.pallas_call(
        _prop2_kernel,
        out_shape=jax.ShapeDtypeStruct((N, h2), jnp.float32),
        grid=grid,
        in_specs=[
            adj_spec,
            pl.BlockSpec((tk, h2), lambda i, k: (k, 0)),    # Z2, contraction tiles
            pl.BlockSpec((tm, h2), lambda i, k: (i, 0)),    # Z2, self (row) tiles
        ],
        out_specs=pl.BlockSpec((tm, h2), lambda i, k: (i, 0)),
        scratch_shapes=[pltpu.VMEM((tm, h2), jnp.float32)],
        compiler_params=cparams,
        cost_estimate=pl.CostEstimate(
            flops=2 * N * N * h2,
            transcendentals=0,
            bytes_accessed=2 * N * N + 4 * N * h2 + 4 * N * h2),
    )(adj_bf, z2, z2)

    # ---- readout + MLP head + log_softmax (tiny; one ungridded call) --------
    vmem = pl.BlockSpec(memory_space=pltpu.MemorySpace.VMEM)
    out = pl.pallas_call(
        _head_kernel,
        out_shape=jax.ShapeDtypeStruct((n_graphs, n_class), jnp.float32),
        in_specs=[vmem] * 6,
        out_specs=vmem,
    )(idx2d, h2_nodes, w3, b3, w4, b4)
    return out


# --------------------------------------------------------------------------
# Reference & init
# --------------------------------------------------------------------------
def gnn_reference(x, adj, idx, params, n_graphs):
    """Exact PyTorch-module semantics in numpy float64."""
    w1, b1, w2, b2, w3, b3, w4, b4 = [np.asarray(p, np.float64) for p in params]
    xn = np.asarray(x, np.float64)
    an = np.asarray(adj, np.float64) + np.eye(adj.shape[0])
    idxn = np.asarray(idx)

    h = np.maximum(an @ (xn @ w1 + b1), 0.0)
    h = np.maximum(an @ (h @ w2 + b2), 0.0)
    pooled = np.zeros((n_graphs, h.shape[1]))
    np.add.at(pooled, idxn, h)                     # scatter_add_
    z = np.maximum(pooled @ w3 + b3, 0.0)
    logits = z @ w4 + b4
    m = logits.max(axis=1, keepdims=True)
    s = logits - m
    return s - np.log(np.exp(s).sum(axis=1, keepdims=True))


def init_params(key, input_dim, h1, h2, h3, n_class):
    """Deterministic synthetic init. Weights stored as (in, out)."""
    dims = [(input_dim, h1), (h1, h2), (h2, h3), (h3, n_class)]
    params = []
    for i, (din, dout) in enumerate(dims):
        kw, kb = jax.random.split(jax.random.fold_in(key, i))
        scale = 1.0 / jnp.sqrt(jnp.float32(din))
        w = jax.random.uniform(kw, (din, dout), jnp.float32, -scale, scale)
        b = jax.random.uniform(kb, (1, dout), jnp.float32, -scale, scale)
        params += [w, b]
    return tuple(params)


if __name__ == "__main__":
    key = jax.random.PRNGKey(0)
    N, input_dim = 16, 8
    h1, h2, h3, n_class = 32, 32, 16, 4

    k_x, k_adj, k_p = jax.random.split(key, 3)
    x = jax.random.normal(k_x, (N, input_dim), jnp.float32)

    # random symmetric 0/1 adjacency with empty diagonal
    a = (jax.random.uniform(k_adj, (N, N)) < 0.3).astype(jnp.float32)
    adj = jnp.maximum(a, a.T) * (1.0 - jnp.eye(N, dtype=jnp.float32))

    # graph membership (3 graphs); n_graphs is a static Python int (no device sync)
    idx_host = [0] * 6 + [1] * 5 + [2] * 5
    idx = jnp.array(idx_host, dtype=jnp.int32)
    n_graphs = max(idx_host) + 1

    params = init_params(k_p, input_dim, h1, h2, h3, n_class)

    fwd = jax.jit(gnn_forward, static_argnames=("n_graphs",))
    out = fwd(x, adj, idx, params, n_graphs=n_graphs)
    jax.block_until_ready(out)

    ref = gnn_reference(x, adj, idx, params, n_graphs)
    assert out.shape == (n_graphs, n_class)
    # Tolerance reflects the intentional bf16 rounding of X / adj / Z2 feeding
    # the MXU propagation matmuls (all accumulation in f32); structural errors
    # would be orders of magnitude larger.
    assert np.allclose(np.asarray(out, np.float64), ref, atol=1e-1, rtol=1e-1), \
        "mismatch vs reference"

    print("KERNEL_OK")
</pallas_src>

<mosaic_0001>
module attributes {stable_mosaic.version = 11 : i64} {
  func.func @_prop1_kernel(%arg0: i32, %arg1: i32, %arg2: memref<16x16xbf16, #tpu.memory_space<vmem>>, %arg3: memref<16x8xbf16, #tpu.memory_space<vmem>>, %arg4: memref<16x8xbf16, #tpu.memory_space<vmem>>, %arg5: memref<8x32xf32, #tpu.memory_space<vmem>>, %arg6: memref<1x32xf32, #tpu.memory_space<vmem>>, %arg7: memref<32x32xf32, #tpu.memory_space<vmem>>, %arg8: memref<1x32xf32, #tpu.memory_space<vmem>>, %arg9: memref<16x32xbf16, #tpu.memory_space<vmem>>, %arg10: memref<16x8xf32, #tpu.memory_space<vmem>>, %arg11: memref<16x1xf32, #tpu.memory_space<vmem>>) attributes {dimension_semantics = [#tpu.dimension_semantics<parallel>, #tpu.dimension_semantics<arbitrary>], iteration_bounds = array<i64: 1, 1>, scalar_prefetch = 0 : i64, scratch_operands = 2 : i64, tpu.core_type = #tpu.core_type<tc>, window_params = [{transform_indices = @transform_0, window_bounds = array<i64: 16, 16>}, {transform_indices = @transform_1, window_bounds = array<i64: 16, 8>}, {transform_indices = @transform_2, window_bounds = array<i64: 16, 8>}, {pipeline_mode = #tpu.pipeline_mode<synchronous>, transform_indices = @transform_3, window_bounds = array<i64: 8, 32>}, {pipeline_mode = #tpu.pipeline_mode<synchronous>, transform_indices = @transform_4, window_bounds = array<i64: 1, 32>}, {pipeline_mode = #tpu.pipeline_mode<synchronous>, transform_indices = @transform_5, window_bounds = array<i64: 32, 32>}, {pipeline_mode = #tpu.pipeline_mode<synchronous>, transform_indices = @transform_6, window_bounds = array<i64: 1, 32>}, {transform_indices = @transform_7, window_bounds = array<i64: 16, 32>}]} {
    %c0_i32 = arith.constant 0 : i32
    %0 = arith.cmpi eq, %arg1, %c0_i32 : i32
    %1 = arith.extui %0 : i1 to i32
    %c0_i32_0 = arith.constant 0 : i32
    %2 = arith.cmpi ne, %1, %c0_i32_0 : i32
    scf.if %2 {
      %c0_15 = arith.constant 0 : index
      %c0_16 = arith.constant 0 : index
      %18 = vector.load %arg4[%c0_15, %c0_16] : memref<16x8xbf16, #tpu.memory_space<vmem>>, vector<16x8xbf16>
      %19 = arith.extf %18 : vector<16x8xbf16> to vector<16x8xf32>
      %c0_17 = arith.constant 0 : index
      %c0_18 = arith.constant 0 : index
      %20 = vector.load %arg10[%c0_17, %c0_18] : memref<16x8xf32, #tpu.memory_space<vmem>>, vector<16x8xf32>
      tpu.vector_store %arg10[%c0_17, %c0_18], %19 {strides = array<i32>} : memref<16x8xf32, #tpu.memory_space<vmem>>, vector<16x8xf32>,
      %cst_19 = arith.constant 0.000000e+00 : f32
      %21 = vector.broadcast %cst_19 : f32 to vector<16x1xf32>
      %c0_20 = arith.constant 0 : index
      %c0_21 = arith.constant 0 : index
      %22 = vector.load %arg11[%c0_20, %c0_21] : memref<16x1xf32, #tpu.memory_space<vmem>>, vector<16x1xf32>
      tpu.vector_store %arg11[%c0_20, %c0_21], %21 {strides = array<i32>} : memref<16x1xf32, #tpu.memory_space<vmem>>, vector<16x1xf32>,
    } else {
    }
    %c0 = arith.constant 0 : index
    %c0_1 = arith.constant 0 : index
    %3 = vector.load %arg2[%c0, %c0_1] : memref<16x16xbf16, #tpu.memory_space<vmem>>, vector<16x16xbf16>
    %c0_2 = arith.constant 0 : index
    %c0_3 = arith.constant 0 : index
    %4 = vector.load %arg10[%c0_2, %c0_3] : memref<16x8xf32, #tpu.memory_space<vmem>>, vector<16x8xf32>
    %c0_4 = arith.constant 0 : index
    %c0_5 = arith.constant 0 : index
    %5 = vector.load %arg3[%c0_4, %c0_5] : memref<16x8xbf16, #tpu.memory_space<vmem>>, vector<16x8xbf16>
    %cst = arith.constant dense<0.000000e+00> : vector<16x8xf32>
    %6 = tpu.matmul %3, %5, %cst {dimension_numbers = #tpu.dot_dimension_numbers<[1], [0], [0], [1], [0, 0, 1, 1], [], []>} : vector<16x16xbf16>, vector<16x8xbf16>, vector<16x8xf32> -> vector<16x8xf32>
    %7 = arith.addf %4, %6 : vector<16x8xf32>
    %c0_6 = arith.constant 0 : index
    %c0_7 = arith.constant 0 : index
    %8 = vector.load %arg10[%c0_6, %c0_7] : memref<16x8xf32, #tpu.memory_space<vmem>>, vector<16x8xf32>
    tpu.vector_store %arg10[%c0_6, %c0_7], %7 {strides = array<i32>} : memref<16x8xf32, #tpu.memory_space<vmem>>, vector<16x8xf32>,
    %c0_8 = arith.constant 0 : index
    %c0_9 = arith.constant 0 : index
    %9 = vector.load %arg11[%c0_8, %c0_9] : memref<16x1xf32, #tpu.memory_space<vmem>>, vector<16x1xf32>
    %10 = arith.extf %3 : vector<16x16xbf16> to vector<16x16xf32>
    %cst_10 = arith.constant dense<0.000000e+00> : vector<16xf32>
    %11 = vector.multi_reduction <add>, %10, %cst_10 [1] : vector<16x16xf32> to vector<16xf32>
    %12 = vector.shape_cast %11 : vector<16xf32> to vector<16x1xf32>
    %13 = arith.addf %9, %12 : vector<16x1xf32>
    %c0_11 = arith.constant 0 : index
    %c0_12 = arith.constant 0 : index
    %14 = vector.load %arg11[%c0_11, %c0_12] : memref<16x1xf32, #tpu.memory_space<vmem>>, vector<16x1xf32>
    tpu.vector_store %arg11[%c0_11, %c0_12], %13 {strides = array<i32>} : memref<16x1xf32, #tpu.memory_space<vmem>>, vector<16x1xf32>,
    %c0_i32_13 = arith.constant 0 : i32
    %15 = arith.cmpi eq, %arg1, %c0_i32_13 : i32
    %16 = arith.extui %15 : i1 to i32
    %c0_i32_14 = arith.constant 0 : i32
    %17 = arith.cmpi ne, %16, %c0_i32_14 : i32
    scf.if %17 {
      %c0_15 = arith.constant 0 : index
      %c0_16 = arith.constant 0 : index
      %18 = vector.load %arg11[%c0_15, %c0_16] : memref<16x1xf32, #tpu.memory_space<vmem>>, vector<16x1xf32>
      %cst_17 = arith.constant 1.000000e+00 : f32
      %19 = vector.broadcast %cst_17 : f32 to vector<16x1xf32>
      %20 = arith.addf %18, %19 : vector<16x1xf32>
      %c0_18 = arith.constant 0 : index
      %c0_19 = arith.constant 0 : index
      %21 = vector.load %arg10[%c0_18, %c0_19] : memref<16x8xf32, #tpu.memory_space<vmem>>, vector<16x8xf32>
      %c0_20 = arith.constant 0 : index
      %c0_21 = arith.constant 0 : index
      %22 = vector.load %arg5[%c0_20, %c0_21] : memref<8x32xf32, #tpu.memory_space<vmem>>, vector<8x32xf32>
      %cst_22 = arith.constant dense<0.000000e+00> : vector<16x32xf32>
      %23 = tpu.matmul %21, %22, %cst_22 {dimension_numbers = #tpu.dot_dimension_numbers<[1], [0], [0], [1], [0, 0, 1, 1], [], []>} : vector<16x8xf32>, vector<8x32xf32>, vector<16x32xf32> -> vector<16x32xf32>
      %c0_23 = arith.constant 0 : index
      %c0_24 = arith.constant 0 : index
      %24 = vector.load %arg6[%c0_23, %c0_24] : memref<1x32xf32, #tpu.memory_space<vmem>>, vector<1x32xf32>
      %25 = vector.broadcast %20 : vector<16x1xf32> to vector<16x32xf32>
      %26 = vector.broadcast %24 : vector<1x32xf32> to vector<16x32xf32>
      %27 = arith.mulf %25, %26 : vector<16x32xf32>
      %28 = arith.addf %23, %27 : vector<16x32xf32>
      %cst_25 = arith.constant 0.000000e+00 : f32
      %29 = vector.broadcast %cst_25 : f32 to vector<16x32xf32>
      %30 = arith.maximumf %28, %29 : vector<16x32xf32>
      %c0_26 = arith.constant 0 : index
      %c0_27 = arith.constant 0 : index
      %31 = vector.load %arg7[%c0_26, %c0_27] : memref<32x32xf32, #tpu.memory_space<vmem>>, vector<32x32xf32>
      %cst_28 = arith.constant dense<0.000000e+00> : vector<16x32xf32>
      %32 = tpu.matmul %30, %31, %cst_28 {dimension_numbers = #tpu.dot_dimension_numbers<[1], [0], [0], [1], [0, 0, 1, 1], [], []>} : vector<16x32xf32>, vector<32x32xf32>, vector<16x32xf32> -> vector<16x32xf32>
      %c0_29 = arith.constant 0 : index
      %c0_30 = arith.constant 0 : index
      %33 = vector.load %arg8[%c0_29, %c0_30] : memref<1x32xf32, #tpu.memory_space<vmem>>, vector<1x32xf32>
      %34 = vector.broadcast %33 : vector<1x32xf32> to vector<16x32xf32>
      %35 = arith.addf %32, %34 : vector<16x32xf32>
      %36 = arith.truncf %35 : vector<16x32xf32> to vector<16x32xbf16>
      %c0_31 = arith.constant 0 : index
      %c0_32 = arith.constant 0 : index
      %37 = vector.load %arg9[%c0_31, %c0_32] : memref<16x32xbf16, #tpu.memory_space<vmem>>, vector<16x32xbf16>
      tpu.vector_store %arg9[%c0_31, %c0_32], %36 {strides = array<i32>} : memref<16x32xbf16, #tpu.memory_space<vmem>>, vector<16x32xbf16>,
    } else {
    }
    return
  }
  func.func @transform_0(%arg0: i32, %arg1: i32) -> (i32, i32) {
    %c0_i32 = arith.constant 0 : i32
    return %arg0, %arg1 : i32, i32
  }
  func.func @transform_1(%arg0: i32, %arg1: i32) -> (i32, i32) {
    %c0_i32 = arith.constant 0 : i32
    %c0_i32_0 = arith.constant 0 : i32
    return %arg1, %c0_i32 : i32, i32
  }
  func.func @transform_2(%arg0: i32, %arg1: i32) -> (i32, i32) {
    %c0_i32 = arith.constant 0 : i32
    %c0_i32_0 = arith.constant 0 : i32
    return %arg0, %c0_i32 : i32, i32
  }
  func.func @transform_3(%arg0: i32, %arg1: i32) -> (i32, i32) {
    %c0_i32 = arith.constant 0 : i32
    %c0_i32_0 = arith.constant 0 : i32
    %c0_i32_1 = arith.constant 0 : i32
    return %c0_i32, %c0_i32_0 : i32, i32
  }
  func.func @transform_4(%arg0: i32, %arg1: i32) -> (i32, i32) {
    %c0_i32 = arith.constant 0 : i32
    %c0_i32_0 = arith.constant 0 : i32
    %c0_i32_1 = arith.constant 0 : i32
    return %c0_i32, %c0_i32_0 : i32, i32
  }
  func.func @transform_5(%arg0: i32, %arg1: i32) -> (i32, i32) {
    %c0_i32 = arith.constant 0 : i32
    %c0_i32_0 = arith.constant 0 : i32
    %c0_i32_1 = arith.constant 0 : i32
    return %c0_i32, %c0_i32_0 : i32, i32
  }
  func.func @transform_6(%arg0: i32, %arg1: i32) -> (i32, i32) {
    %c0_i32 = arith.constant 0 : i32
    %c0_i32_0 = arith.constant 0 : i32
    %c0_i32_1 = arith.constant 0 : i32
    return %c0_i32, %c0_i32_0 : i32, i32
  }
  func.func @transform_7(%arg0: i32, %arg1: i32) -> (i32, i32) {
    %c0_i32 = arith.constant 0 : i32
    %c0_i32_0 = arith.constant 0 : i32
    return %arg0, %c0_i32 : i32, i32
  }
}

module attributes {stable_mosaic.version = 11 : i64} {
  func.func @_prop2_kernel(%arg0: i32, %arg1: i32, %arg2: memref<16x16xbf16, #tpu.memory_space<vmem>>, %arg3: memref<16x32xbf16, #tpu.memory_space<vmem>>, %arg4: memref<16x32xbf16, #tpu.memory_space<vmem>>, %arg5: memref<16x32xf32, #tpu.memory_space<vmem>>, %arg6: memref<16x32xf32, #tpu.memory_space<vmem>>) attributes {dimension_semantics = [#tpu.dimension_semantics<parallel>, #tpu.dimension_semantics<arbitrary>], iteration_bounds = array<i64: 1, 1>, scalar_prefetch = 0 : i64, scratch_operands = 1 : i64, tpu.core_type = #tpu.core_type<tc>, window_params = [{transform_indices = @transform_0, window_bounds = array<i64: 16, 16>}, {transform_indices = @transform_1, window_bounds = array<i64: 16, 32>}, {transform_indices = @transform_2, window_bounds = array<i64: 16, 32>}, {transform_indices = @transform_3, window_bounds = array<i64: 16, 32>}]} {
    %c0_i32 = arith.constant 0 : i32
    %0 = arith.cmpi eq, %arg1, %c0_i32 : i32
    %1 = arith.extui %0 : i1 to i32
    %c0_i32_0 = arith.constant 0 : i32
    %2 = arith.cmpi ne, %1, %c0_i32_0 : i32
    scf.if %2 {
      %c0_10 = arith.constant 0 : index
      %c0_11 = arith.constant 0 : index
      %12 = vector.load %arg4[%c0_10, %c0_11] : memref<16x32xbf16, #tpu.memory_space<vmem>>, vector<16x32xbf16>
      %13 = arith.extf %12 : vector<16x32xbf16> to vector<16x32xf32>
      %c0_12 = arith.constant 0 : index
      %c0_13 = arith.constant 0 : index
      %14 = vector.load %arg6[%c0_12, %c0_13] : memref<16x32xf32, #tpu.memory_space<vmem>>, vector<16x32xf32>
      tpu.vector_store %arg6[%c0_12, %c0_13], %13 {strides = array<i32>} : memref<16x32xf32, #tpu.memory_space<vmem>>, vector<16x32xf32>,
    } else {
    }
    %c0 = arith.constant 0 : index
    %c0_1 = arith.constant 0 : index
    %3 = vector.load %arg6[%c0, %c0_1] : memref<16x32xf32, #tpu.memory_space<vmem>>, vector<16x32xf32>
    %c0_2 = arith.constant 0 : index
    %c0_3 = arith.constant 0 : index
    %4 = vector.load %arg2[%c0_2, %c0_3] : memref<16x16xbf16, #tpu.memory_space<vmem>>, vector<16x16xbf16>
    %c0_4 = arith.constant 0 : index
    %c0_5 = arith.constant 0 : index
    %5 = vector.load %arg3[%c0_4, %c0_5] : memref<16x32xbf16, #tpu.memory_space<vmem>>, vector<16x32xbf16>
    %cst = arith.constant dense<0.000000e+00> : vector<16x32xf32>
    %6 = tpu.matmul %4, %5, %cst {dimension_numbers = #tpu.dot_dimension_numbers<[1], [0], [0], [1], [0, 0, 1, 1], [], []>} : vector<16x16xbf16>, vector<16x32xbf16>, vector<16x32xf32> -> vector<16x32xf32>
    %7 = arith.addf %3, %6 : vector<16x32xf32>
    %c0_6 = arith.constant 0 : index
    %c0_7 = arith.constant 0 : index
    %8 = vector.load %arg6[%c0_6, %c0_7] : memref<16x32xf32, #tpu.memory_space<vmem>>, vector<16x32xf32>
    tpu.vector_store %arg6[%c0_6, %c0_7], %7 {strides = array<i32>} : memref<16x32xf32, #tpu.memory_space<vmem>>, vector<16x32xf32>,
    %c0_i32_8 = arith.constant 0 : i32
    %9 = arith.cmpi eq, %arg1, %c0_i32_8 : i32
    %10 = arith.extui %9 : i1 to i32
    %c0_i32_9 = arith.constant 0 : i32
    %11 = arith.cmpi ne, %10, %c0_i32_9 : i32
    scf.if %11 {
      %c0_10 = arith.constant 0 : index
      %c0_11 = arith.constant 0 : index
      %12 = vector.load %arg6[%c0_10, %c0_11] : memref<16x32xf32, #tpu.memory_space<vmem>>, vector<16x32xf32>
      %cst_12 = arith.constant 0.000000e+00 : f32
      %13 = vector.broadcast %cst_12 : f32 to vector<16x32xf32>
      %14 = arith.maximumf %12, %13 : vector<16x32xf32>
      %c0_13 = arith.constant 0 : index
      %c0_14 = arith.constant 0 : index
      %15 = vector.load %arg5[%c0_13, %c0_14] : memref<16x32xf32, #tpu.memory_space<vmem>>, vector<16x32xf32>
      tpu.vector_store %arg5[%c0_13, %c0_14], %14 {strides = array<i32>} : memref<16x32xf32, #tpu.memory_space<vmem>>, vector<16x32xf32>,
    } else {
    }
    return
  }
  func.func @transform_0(%arg0: i32, %arg1: i32) -> (i32, i32) {
    %c0_i32 = arith.constant 0 : i32
    return %arg0, %arg1 : i32, i32
  }
  func.func @transform_1(%arg0: i32, %arg1: i32) -> (i32, i32) {
    %c0_i32 = arith.constant 0 : i32
    %c0_i32_0 = arith.constant 0 : i32
    return %arg1, %c0_i32 : i32, i32
  }
  func.func @transform_2(%arg0: i32, %arg1: i32) -> (i32, i32) {
    %c0_i32 = arith.constant 0 : i32
    %c0_i32_0 = arith.constant 0 : i32
    return %arg0, %c0_i32 : i32, i32
  }
  func.func @transform_3(%arg0: i32, %arg1: i32) -> (i32, i32) {
    %c0_i32 = arith.constant 0 : i32
    %c0_i32_0 = arith.constant 0 : i32
    return %arg0, %c0_i32 : i32, i32
  }
}

module attributes {stable_mosaic.version = 11 : i64} {
  func.func @_head_kernel(%arg0: memref<1x16xi32, #tpu.memory_space<vmem>>, %arg1: memref<16x32xf32, #tpu.memory_space<vmem>>, %arg2: memref<32x16xf32, #tpu.memory_space<vmem>>, %arg3: memref<1x16xf32, #tpu.memory_space<vmem>>, %arg4: memref<16x4xf32, #tpu.memory_space<vmem>>, %arg5: memref<1x4xf32, #tpu.memory_space<vmem>>, %arg6: memref<3x4xf32, #tpu.memory_space<vmem>>) attributes {dimension_semantics = [], scalar_prefetch = 0 : i64, scratch_operands = 0 : i64, tpu.core_type = #tpu.core_type<tc>} {
    %0 = tpu.iota {dimensions = array<i32: 0>} : vector<3x16xi32>
    %c0 = arith.constant 0 : index
    %c0_0 = arith.constant 0 : index
    %1 = vector.load %arg0[%c0, %c0_0] : memref<1x16xi32, #tpu.memory_space<vmem>>, vector<1x16xi32>
    %2 = vector.broadcast %1 : vector<1x16xi32> to vector<3x16xi32>
    %3 = arith.cmpi eq, %0, %2 : vector<3x16xi32>
    %4 = arith.extui %3 : vector<3x16xi1> to vector<3x16xi32>
    %5 = arith.sitofp %4 : vector<3x16xi32> to vector<3x16xf32>
    %c0_1 = arith.constant 0 : index
    %c0_2 = arith.constant 0 : index
    %6 = vector.load %arg1[%c0_1, %c0_2] : memref<16x32xf32, #tpu.memory_space<vmem>>, vector<16x32xf32>
    %cst = arith.constant dense<0.000000e+00> : vector<3x32xf32>
    %7 = tpu.matmul %5, %6, %cst {dimension_numbers = #tpu.dot_dimension_numbers<[1], [0], [0], [1], [0, 0, 1, 1], [], []>} : vector<3x16xf32>, vector<16x32xf32>, vector<3x32xf32> -> vector<3x32xf32>
    %c0_3 = arith.constant 0 : index
    %c0_4 = arith.constant 0 : index
    %8 = vector.load %arg2[%c0_3, %c0_4] : memref<32x16xf32, #tpu.memory_space<vmem>>, vector<32x16xf32>
    %cst_5 = arith.constant dense<0.000000e+00> : vector<3x16xf32>
    %9 = tpu.matmul %7, %8, %cst_5 {dimension_numbers = #tpu.dot_dimension_numbers<[1], [0], [0], [1], [0, 0, 1, 1], [], []>} : vector<3x32xf32>, vector<32x16xf32>, vector<3x16xf32> -> vector<3x16xf32>
    %c0_6 = arith.constant 0 : index
    %c0_7 = arith.constant 0 : index
    %10 = vector.load %arg3[%c0_6, %c0_7] : memref<1x16xf32, #tpu.memory_space<vmem>>, vector<1x16xf32>
    %11 = vector.broadcast %10 : vector<1x16xf32> to vector<3x16xf32>
    %12 = arith.addf %9, %11 : vector<3x16xf32>
    %cst_8 = arith.constant 0.000000e+00 : f32
    %13 = vector.broadcast %cst_8 : f32 to vector<3x16xf32>
    %14 = arith.maximumf %12, %13 : vector<3x16xf32>
    %c0_9 = arith.constant 0 : index
    %c0_10 = arith.constant 0 : index
    %15 = vector.load %arg4[%c0_9, %c0_10] : memref<16x4xf32, #tpu.memory_space<vmem>>, vector<16x4xf32>
    %cst_11 = arith.constant dense<0.000000e+00> : vector<3x4xf32>
    %16 = tpu.matmul %14, %15, %cst_11 {dimension_numbers = #tpu.dot_dimension_numbers<[1], [0], [0], [1], [0, 0, 1, 1], [], []>} : vector<3x16xf32>, vector<16x4xf32>, vector<3x4xf32> -> vector<3x4xf32>
    %c0_12 = arith.constant 0 : index
    %c0_13 = arith.constant 0 : index
    %17 = vector.load %arg5[%c0_12, %c0_13] : memref<1x4xf32, #tpu.memory_space<vmem>>, vector<1x4xf32>
    %18 = vector.broadcast %17 : vector<1x4xf32> to vector<3x4xf32>
    %19 = arith.addf %16, %18 : vector<3x4xf32>
    %cst_14 = arith.constant dense<0xFF800000> : vector<3xf32>
    %20 = vector.multi_reduction <maximumf>, %19, %cst_14 [1] : vector<3x4xf32> to vector<3xf32>
    %21 = vector.shape_cast %20 : vector<3xf32> to vector<3x1xf32>
    %22 = vector.broadcast %21 : vector<3x1xf32> to vector<3x4xf32>
    %23 = arith.subf %19, %22 : vector<3x4xf32>
    %24 = math.exp %23 : vector<3x4xf32>
    %cst_15 = arith.constant dense<0.000000e+00> : vector<3xf32>
    %25 = vector.multi_reduction <add>, %24, %cst_15 [1] : vector<3x4xf32> to vector<3xf32>
    %26 = vector.shape_cast %25 : vector<3xf32> to vector<3x1xf32>
    %27 = math.log %26 : vector<3x1xf32>
    %28 = vector.broadcast %27 : vector<3x1xf32> to vector<3x4xf32>
    %29 = arith.subf %23, %28 : vector<3x4xf32>
    %c0_16 = arith.constant 0 : index
    %c0_17 = arith.constant 0 : index
    %30 = vector.load %arg6[%c0_16, %c0_17] : memref<3x4xf32, #tpu.memory_space<vmem>>, vector<3x4xf32>
    tpu.vector_store %arg6[%c0_16, %c0_17], %29 {strides = array<i32>} : memref<3x4xf32, #tpu.memory_space<vmem>>, vector<3x4xf32>,
    return
  }
}

</mosaic_0001>

<llo_original>
// kernel: gnn_forward.5
$region0: #{gnn_forward.5}
  #allocation0 [shape = 'u32[]', space=smem, size = 0x4, offset = 0x4, fixed_abs, tag = 'smem constant byte address 0x4 - core index']
  #allocation1 [shape = 'u32[72,128]{1,0:T(1,128)}', space=vmem, size = 0x9000, scoped, tag = 'internal scratch']
  %s0 = inlined_call_operand.vmem [shape: s32[1,16], index: 0, kind: input, shape index: {}]
  %s1 = inlined_call_operand.vmem [shape: f32[16,32], index: 1, kind: input, shape index: {}]
  %s2 = inlined_call_operand.vmem [shape: f32[32,16], index: 2, kind: input, shape index: {}]
  %s3 = inlined_call_operand.vmem [shape: f32[1,16], index: 3, kind: input, shape index: {}]
  %s4 = inlined_call_operand.vmem [shape: f32[16,4], index: 4, kind: input, shape index: {}]
  %s5 = inlined_call_operand.vmem [shape: f32[1,4], index: 5, kind: input, shape index: {}]
  %s6 = inlined_call_operand.hbm [shape: f32[3,4], index: 6, kind: output, shape index: {}]
  %s7 = sld [smem:[#allocation0]]
  $region34: #{gnn_forward.5} parent=0
    _
  %s9 = ssub.s32 1, %s7
  %s10 = scalar_select 0, %s9, %s7
  $region1: #{gnn_forward.5} parent=0
    #allocation2 [shape = 'u8[2048]{0}', space=vmem, size = 0x800, scoped, tag = 'output window, operand 0, single buffered']
    #allocation3 [shape = 's32[1]{0}', space=sflag, size = 0x4, scoped, tag = 'scoped memory for gnn_forward.5']
    %11 = vsyncpa [#allocation3], 0
    // Predicated region
    $region2: #{gnn_forward.5} parent=1 // pred_check
      _
    $region3: #{gnn_forward.5} parent=1 // pred_check_branch
      %13 = sbr.rel (0) target = $region5
    $region4: #{gnn_forward.5} parent=1 // pred_region
      _
    $region5: #{gnn_forward.5} parent=1 // pred_fallthru
      _
    // Predicated region
    $region6: #{gnn_forward.5} parent=1 // pred_check
      _
    $region7: #{gnn_forward.5} parent=1 // pred_check_branch
      %15 = sbr.rel (0) target = $region9
    $region8: #{gnn_forward.5} parent=1 // pred_region
      _
    $region9: #{gnn_forward.5} parent=1 // pred_fallthru
      _
    // Predicated region
    $region10: #{gnn_forward.5} parent=1 // pred_check
      _
    $region11: #{gnn_forward.5} parent=1 // pred_check_branch
      %17 = sbr.rel (0) target = $region13
    $region12: #{gnn_forward.5} parent=1 // pred_region
      _
    $region13: #{gnn_forward.5} parent=1 // pred_fallthru
      _
    // Predicated region
    $region14: #{gnn_forward.5} parent=1 // pred_check
      _
    $region15: #{gnn_forward.5} parent=1 // pred_check_branch
      %19 = sbr.rel (0) target = $region17
    $region16: #{gnn_forward.5} parent=1 // pred_region
      _
    $region17: #{gnn_forward.5} parent=1 // pred_fallthru
      _
    // Predicated region
    $region18: #{gnn_forward.5} parent=1 // pred_check
      _
    $region19: #{gnn_forward.5} parent=1 // pred_check_branch
      %21 = sbr.rel (0) target = $region21
    $region20: #{gnn_forward.5} parent=1 // pred_region
      _
    $region21: #{gnn_forward.5} parent=1 // pred_fallthru
      _
    // Predicated region
    $region22: #{gnn_forward.5} parent=1 // pred_check
      _
    $region23: #{gnn_forward.5} parent=1 // pred_check_branch
      %23 = sbr.rel (0) target = $region25
    $region24: #{gnn_forward.5} parent=1 // pred_region
      _
    $region25: #{gnn_forward.5} parent=1 // pred_fallthru
      _
    %v24 = vlaneseq
    %v25 = vshrl.u32 %v24, 7
    %v26 = vld [vmem:[%s0] sm:$0x1]
    %v27 = vperm.slane %v26, 0
    %vm28 = vcmp.eq.s32.totalorder %v25, %v27
    %v29 = vsel %vm28, 1, 0
    %v30 = vcvt.s32.f32 %v29
    %v31 = vld [vmem:[%s1] sm:$0xff]
    %v32 = vld [vmem:[%s1 + $0x8] sm:$0xff]
    %vm33 = vcmask 130048
    %v35 = vsel %vm33, %v30, 0
    %37 = vmatpush.msra.mxu0 0.0
    %38 = vmatpush.msra.mxu0 0.0
    %39 = vmatpush.msra.mxu0 0.0
    %40 = vmatpush.msra.mxu0 0.0
    %41 = vmatpush.msra.mxu0 0.0
    %42 = vmatpush.msra.mxu0 0.0
    %43 = vmatpush.msra.mxu0 0.0
    %44 = vmatpush.msra.mxu0 0.0
    %45 = vmatpush.msra.mxu0 0.0
    %46 = vmatpush.msra.mxu0 0.0
    %47 = vmatpush.msra.mxu0 0.0
    %48 = vmatpush.msra.mxu0 0.0
    %49 = vmatpush.msra.mxu0 0.0
    %50 = vmatpush.msra.mxu0 0.0
    %51 = vmatpush.msra.mxu0 %v32
    %52 = vmatpush.msra.mxu0 %v31
    %53 = vmatmul.f32.gmra.mxu0 %v35
    %v54 = vpop.f32.mrf.mxu0
    %v55 = vadd.f32 0.0, %v54
    %56 = vdwg.mxu0
    %v57 = vld [vmem:[%s2] sm:$0xff]
    %v58 = vld [vmem:[%s2 + $0x8] sm:$0xff]
    %v59 = vld [vmem:[%s2 + $0x10] sm:$0xff]
    %v60 = vld [vmem:[%s2 + $0x18] sm:$0xff]
    %v61 = vld [vmem:[%s3] sm:$0x1]
    %v63 = vperm.slane %v61, 0
    %vm65 = vcmask 261120
    %v67 = vsel %vm65, %v55, 0
    %69 = vmatpush.msra.mxu0 0.0
    %70 = vmatpush.msra.mxu0 0.0
    %71 = vmatpush.msra.mxu0 0.0
    %72 = vmatpush.msra.mxu0 0.0
    %73 = vmatpush.msra.mxu0 0.0
    %74 = vmatpush.msra.mxu0 0.0
    %75 = vmatpush.msra.mxu0 0.0
    %76 = vmatpush.msra.mxu0 0.0
    %77 = vmatpush.msra.mxu0 0.0
    %78 = vmatpush.msra.mxu0 0.0
    %79 = vmatpush.msra.mxu0 0.0
    %80 = vmatpush.msra.mxu0 0.0
    %81 = vmatpush.msra.mxu0 %v60
    %82 = vmatpush.msra.mxu0 %v59
    %83 = vmatpush.msra.mxu0 %v58
    %84 = vmatpush.msra.mxu0 %v57
    %85 = vmatmul.f32.gmra.mxu0 %v67
    %v86 = vpop.f32.mrf.mxu0
    %v87 = vadd.f32 %v63, %v86
    %88 = vdwg.mxu0
    %v89 = vmax.f32 %v87, 0.0
    %v90 = vld [vmem:[%s4] sm:$0xff]
    %v91 = vld [vmem:[%s4 + $0x8] sm:$0xff]
    %v92 = vld [vmem:[%s5] sm:$0x1]
    %v94 = vperm.slane %v92, 0
    %v97 = vsel %vm33, %v89, 0
    %99 = vmatpush.msra.mxu0 0.0
    %100 = vmatpush.msra.mxu0 0.0
    %101 = vmatpush.msra.mxu0 0.0
    %102 = vmatpush.msra.mxu0 0.0
    %103 = vmatpush.msra.mxu0 0.0
    %104 = vmatpush.msra.mxu0 0.0
    %105 = vmatpush.msra.mxu0 0.0
    %106 = vmatpush.msra.mxu0 0.0
    %107 = vmatpush.msra.mxu0 0.0
    %108 = vmatpush.msra.mxu0 0.0
    %109 = vmatpush.msra.mxu0 0.0
    %110 = vmatpush.msra.mxu0 0.0
    %111 = vmatpush.msra.mxu0 0.0
    %112 = vmatpush.msra.mxu0 0.0
    %113 = vmatpush.msra.mxu0 %v91
    %114 = vmatpush.msra.mxu0 %v90
    %115 = vmatmul.f32.gmra.mxu0 %v97
    %v116 = vpop.f32.mrf.mxu0
    %v117 = vadd.f32 %v94, %v116
    %118 = vdwg.mxu0
    %vm119 = vcmask 26624
    %v120 = vsel %vm119, %v117, -inf
    %121 = vmax.xlane.f32.xlu0 %v120
    %v122 = vpop.xlane.xlu0 %121
    %v123 = vsub.f32 %v117, %v122
    %v124 = vmul.f32 %v123, 1.442695
    %v125 = vpow.pop %v124
    %v126 = vsel %vm119, %v125, 0.0
    %127 = vadd.xlane.f32.xlu0 %v126
    %v128 = vpop.xlane.xlu0 %127
    %v129 = vlog2.pop %v128
    %v130 = vmul.f32 %v129, 0.6931472
    %v131 = vsub.f32 %v123, %v130
    %132 = vst.msk [vmem:[#allocation2] sm:$0x7] %vm119, %v131
    // Predicated region
    $region26: #{gnn_forward.5} parent=1 // pred_check
      _
    $region27: #{gnn_forward.5} parent=1 // pred_check_branch
      %134 = sbr.rel (0) target = $region29
    $region28: #{gnn_forward.5} parent=1 // pred_region
      %136 = vsyncadd [#allocation3], 0
      %s138 = sshll.u32 [#allocation2], 4
      %s139 = int_to_ptr.vmem [resolvable:$true] %s138
      %s140 = sshll.u32 %s6, 4
      %s141 = int_to_ptr.hbm [resolvable:$true] %s140
      %143 = dma.vmem_to_hbm [thread:$0]  %s139, 64, %s141, [#allocation3]
    $region29: #{gnn_forward.5} parent=1 // pred_fallthru
      _
    // Predicated region
    $region30: #{gnn_forward.5} parent=1 // pred_check
      _
    $region31: #{gnn_forward.5} parent=1 // pred_check_branch
      %145 = sbr.rel (0) target = $region33
    $region32: #{gnn_forward.5} parent=1 // pred_region
      %147 = dma.done [#allocation3], 64
    $region33: #{gnn_forward.5} parent=1 // pred_fallthru
      _
    %148 = vsyncpa [#allocation3], 1

// kernel: gnn_forward.4
$region0: #{gnn_forward.4}
  #allocation0 [shape = 'u32[]', space=smem, size = 0x4, offset = 0x4, fixed_abs, tag = 'smem constant byte address 0x4 - core index']
  #allocation1 [shape = 'u32[72,128]{1,0:T(1,128)}', space=vmem, size = 0x9000, scoped, tag = 'internal scratch']
  #allocation2 [shape = 'f32[16,32]{1,0:T(8,128)}', space=vmem, size = 0x2000, scoped, tag = 'scratch operand']
  %s0 = inlined_call_operand.vmem [shape: bf16[16,16], index: 0, kind: input, shape index: {}]
  %s1 = inlined_call_operand.vmem [shape: bf16[16,32], index: 1, kind: input, shape index: {}, may-alias: {1,2}]
  %s2 = inlined_call_operand.vmem [shape: bf16[16,32], index: 2, kind: input, shape index: {}, may-alias: {1,2}]
  %s3 = inlined_call_operand.vmem [shape: f32[16,32], index: 3, kind: output, shape index: {}]
  %s4 = sld [smem:[#allocation0]]
  $region30: #{gnn_forward.4} parent=0
    _
  %s6 = ssub.s32 1, %s4
  %s7 = scalar_select 0, %s6, %s4
  // Predicated region
  $region2: #{gnn_forward.4} parent=0 // pred_check
    _
  $region3: #{gnn_forward.4} parent=0 // pred_check_branch
    %9 = sbr.rel (0) target = $region5
  $region4: #{gnn_forward.4} parent=0 // pred_region
    _
  $region5: #{gnn_forward.4} parent=0 // pred_fallthru
    _
  // Predicated region
  $region6: #{gnn_forward.4} parent=0 // pred_check
    _
  $region7: #{gnn_forward.4} parent=0 // pred_check_branch
    %11 = sbr.rel (0) target = $region9
  $region8: #{gnn_forward.4} parent=0 // pred_region
    _
  $region9: #{gnn_forward.4} parent=0 // pred_fallthru
    _
  // Predicated region
  $region10: #{gnn_forward.4} parent=0 // pred_check
    _
  $region11: #{gnn_forward.4} parent=0 // pred_check_branch
    %13 = sbr.rel (0) target = $region13
  $region12: #{gnn_forward.4} parent=0 // pred_region
    _
  $region13: #{gnn_forward.4} parent=0 // pred_fallthru
    _
  %p15 = scmp.eq.s32.totalorder 0, 0
  // Predicated region
  $region14: #{gnn_forward.4} parent=0 // pred_check
    %p16 = pneg %p15
  $region15: #{gnn_forward.4} parent=0 // pred_check_branch
    %18 = sbr.rel (%p16) target = $region17
  $region16: #{gnn_forward.4} parent=0 // pred_region
    %v19 = vld [vmem:[%s2] sm:$0xf]
    %v20 = vld [vmem:[%s2 + $0x4] sm:$0xf]
    %v21 = vunpack.c.l.bf16 %v19
    %v22 = vunpack.c.l.bf16 %v20
    %vm23 = vcmask 261120
    %24 = vst.msk [vmem:[#allocation2] sm:$0xff] %vm23, %v21
    %25 = vst.msk [vmem:[#allocation2 + $0x8] sm:$0xff] %vm23, %v22
  $region17: #{gnn_forward.4} parent=0 // pred_fallthru
    _
  %v26 = vld [vmem:[#allocation2] sm:$0xff]
  %v27 = vld [vmem:[#allocation2 + $0x8] sm:$0xff]
  %v28 = vld [vmem:[%s0] sm:$0xf]
  %v29 = vld [vmem:[%s0 + $0x4] sm:$0xf]
  %v30 = vld [vmem:[%s1] sm:$0xf]
  %v31 = vld [vmem:[%s1 + $0x4] sm:$0xf]
  %v34 = vunpack.c.l.b16 %v28
  %v35 = vunpack.c.l.b16 %v29
  %v36 = vpack.c.b16 %v35, %v34
  %v39 = vunpack.c.l.b16 %v30
  %v40 = vunpack.c.l.b16 %v31
  %v41 = vpack.c.b16 %v40, %v39
  %vm43 = vcmask 130048
  %v45 = vsel %vm43, %v36, 0
  %47 = vmatpush.bf16.msra.mxu0 0
  %48 = vmatpush.bf16.msra.mxu0 0
  %49 = vmatpush.bf16.msra.mxu0 0
  %50 = vmatpush.bf16.msra.mxu0 0
  %51 = vmatpush.bf16.msra.mxu0 0
  %52 = vmatpush.bf16.msra.mxu0 0
  %53 = vmatpush.bf16.msra.mxu0 0
  %54 = vmatpush.bf16.msra.mxu0 %v41
  %55 = vmatmul.bf16.gmra.mxu0 %v45
  %v56 = vpop.f32.mrf.mxu0
  %v57 = vadd.f32 0.0, %v56
  %v58 = vpop.f32.mrf.mxu0
  %v59 = vadd.f32 0.0, %v58
  %60 = vdwg.mxu0
  %v61 = vadd.f32 %v26, %v57
  %v62 = vadd.f32 %v27, %v59
  %vm63 = vcmask 261120
  %64 = vst.msk [vmem:[#allocation2] sm:$0xff] %vm63, %v61
  %65 = vst.msk [vmem:[#allocation2 + $0x8] sm:$0xff] %vm63, %v62
  // Predicated region
  $region18: #{gnn_forward.4} parent=0 // pred_check
    %p66 = pneg %p15
  $region19: #{gnn_forward.4} parent=0 // pred_check_branch
    %68 = sbr.rel (%p66) target = $region21
  $region20: #{gnn_forward.4} parent=0 // pred_region
    %v69 = vld [vmem:[#allocation2] sm:$0xff]
    %v70 = vld [vmem:[#allocation2 + $0x8] sm:$0xff]
    %v71 = vmax.f32 %v69, 0.0
    %v72 = vmax.f32 %v70, 0.0
    %73 = vst.msk [vmem:[%s3] sm:$0xff] %vm63, %v71
    %74 = vst.msk [vmem:[%s3 + $0x8] sm:$0xff] %vm63, %v72
  $region21: #{gnn_forward.4} parent=0 // pred_fallthru
    _
  // Predicated region
  $region22: #{gnn_forward.4} parent=0 // pred_check
    _
  $region23: #{gnn_forward.4} parent=0 // pred_check_branch
    %76 = sbr.rel (0) target = $region25
  $region24: #{gnn_forward.4} parent=0 // pred_region
    _
  $region25: #{gnn_forward.4} parent=0 // pred_fallthru
    _
  // Predicated region
  $region26: #{gnn_forward.4} parent=0 // pred_check
    _
  $region27: #{gnn_forward.4} parent=0 // pred_check_branch
    %78 = sbr.rel (0) target = $region29
  $region28: #{gnn_forward.4} parent=0 // pred_region
    _
  $region29: #{gnn_forward.4} parent=0 // pred_fallthru
    _

// kernel: gnn_forward.3
$region0: #{gnn_forward.3}
  #allocation0 [shape = 'u32[]', space=smem, size = 0x4, offset = 0x4, fixed_abs, tag = 'smem constant byte address 0x4 - core index']
  #allocation1 [shape = 'u32[72,128]{1,0:T(1,128)}', space=vmem, size = 0x9000, scoped, tag = 'internal scratch']
  #allocation2 [shape = 'f32[16,8]{1,0:T(8,128)}', space=vmem, size = 0x2000, scoped, tag = 'scratch operand']
  #allocation3 [shape = 'f32[16,1]{1,0:T(8,128)}', space=vmem, size = 0x2000, scoped, tag = 'scratch operand']
  %s0 = inlined_call_operand.vmem [shape: bf16[16,16], index: 0, kind: input, shape index: {}]
  %s1 = inlined_call_operand.vmem [shape: bf16[16,8], index: 1, kind: input, shape index: {}, may-alias: {1,2}]
  %s2 = inlined_call_operand.vmem [shape: bf16[16,8], index: 2, kind: input, shape index: {}, may-alias: {1,2}]
  %s3 = inlined_call_operand.vmem [shape: f32[8,32], index: 3, kind: input, shape index: {}]
  %s4 = inlined_call_operand.vmem [shape: f32[1,32], index: 4, kind: input, shape index: {}]
  %s5 = inlined_call_operand.vmem [shape: f32[32,32], index: 5, kind: input, shape index: {}]
  %s6 = inlined_call_operand.vmem [shape: f32[1,32], index: 6, kind: input, shape index: {}]
  %s7 = inlined_call_operand.vmem [shape: bf16[16,32], index: 7, kind: output, shape index: {}]
  %s8 = sld [smem:[#allocation0]]
  $region46: #{gnn_forward.3} parent=0
    _
  %s10 = ssub.s32 1, %s8
  %s11 = scalar_select 0, %s10, %s8
  // Predicated region
  $region2: #{gnn_forward.3} parent=0 // pred_check
    _
  $region3: #{gnn_forward.3} parent=0 // pred_check_branch
    %13 = sbr.rel (0) target = $region5
  $region4: #{gnn_forward.3} parent=0 // pred_region
    _
  $region5: #{gnn_forward.3} parent=0 // pred_fallthru
    _
  // Predicated region
  $region6: #{gnn_forward.3} parent=0 // pred_check
    _
  $region7: #{gnn_forward.3} parent=0 // pred_check_branch
    %15 = sbr.rel (0) target = $region9
  $region8: #{gnn_forward.3} parent=0 // pred_region
    _
  $region9: #{gnn_forward.3} parent=0 // pred_fallthru
    _
  // Predicated region
  $region10: #{gnn_forward.3} parent=0 // pred_check
    _
  $region11: #{gnn_forward.3} parent=0 // pred_check_branch
    %17 = sbr.rel (0) target = $region13
  $region12: #{gnn_forward.3} parent=0 // pred_region
    _
  $region13: #{gnn_forward.3} parent=0 // pred_fallthru
    _
  // Predicated region
  $region14: #{gnn_forward.3} parent=0 // pred_check
    _
  $region15: #{gnn_forward.3} parent=0 // pred_check_branch
    %19 = sbr.rel (0) target = $region17
  $region16: #{gnn_forward.3} parent=0 // pred_region
    _
  $region17: #{gnn_forward.3} parent=0 // pred_fallthru
    _
  // Predicated region
  $region18: #{gnn_forward.3} parent=0 // pred_check
    _
  $region19: #{gnn_forward.3} parent=0 // pred_check_branch
    %21 = sbr.rel (0) target = $region21
  $region20: #{gnn_forward.3} parent=0 // pred_region
    _
  $region21: #{gnn_forward.3} parent=0 // pred_fallthru
    _
  // Predicated region
  $region22: #{gnn_forward.3} parent=0 // pred_check
    _
  $region23: #{gnn_forward.3} parent=0 // pred_check_branch
    %23 = sbr.rel (0) target = $region25
  $region24: #{gnn_forward.3} parent=0 // pred_region
    _
  $region25: #{gnn_forward.3} parent=0 // pred_fallthru
    _
  // Predicated region
  $region26: #{gnn_forward.3} parent=0 // pred_check
    _
  $region27: #{gnn_forward.3} parent=0 // pred_check_branch
    %25 = sbr.rel (0) target = $region29
  $region28: #{gnn_forward.3} parent=0 // pred_region
    _
  $region29: #{gnn_forward.3} parent=0 // pred_fallthru
    _
  %p27 = scmp.eq.s32.totalorder 0, 0
  // Predicated region
  $region30: #{gnn_forward.3} parent=0 // pred_check
    %p28 = pneg %p27
  $region31: #{gnn_forward.3} parent=0 // pred_check_branch
    %30 = sbr.rel (%p28) target = $region33
  $region32: #{gnn_forward.3} parent=0 // pred_region
    %v31 = vld [vmem:[%s2] sm:$0xf]
    %v32 = vld [vmem:[%s2 + $0x4] sm:$0xf]
    %v33 = vunpack.c.l.bf16 %v31
    %v34 = vunpack.c.l.bf16 %v32
    %vm35 = vcmask 64512
    %36 = vst.msk [vmem:[#allocation2] sm:$0xff] %vm35, %v33
    %37 = vst.msk [vmem:[#allocation2 + $0x8] sm:$0xff] %vm35, %v34
    %vm38 = vcmask 7168
    %39 = vst.msk [vmem:[#allocation3] sm:$0xff] %vm38, 0.0
    %40 = vst.msk [vmem:[#allocation3 + $0x8] sm:$0xff] %vm38, 0.0
  $region33: #{gnn_forward.3} parent=0 // pred_fallthru
    _
  %v41 = vld [vmem:[%s0] sm:$0xf]
  %v42 = vld [vmem:[%s0 + $0x4] sm:$0xf]
  %v43 = vld [vmem:[#allocation2] sm:$0xff]
  %v44 = vld [vmem:[#allocation2 + $0x8] sm:$0xff]
  %v45 = vld [vmem:[%s1] sm:$0xf]
  %v46 = vld [vmem:[%s1 + $0x4] sm:$0xf]
  %v49 = vunpack.c.l.b16 %v41
  %v50 = vunpack.c.l.b16 %v42
  %v51 = vpack.c.b16 %v50, %v49
  %v54 = vunpack.c.l.b16 %v45
  %v55 = vunpack.c.l.b16 %v46
  %v56 = vpack.c.b16 %v55, %v54
  %vm58 = vcmask 130048
  %v60 = vsel %vm58, %v51, 0
  %62 = vmatpush.bf16.msra.mxu0 0
  %63 = vmatpush.bf16.msra.mxu0 0
  %64 = vmatpush.bf16.msra.mxu0 0
  %65 = vmatpush.bf16.msra.mxu0 0
  %66 = vmatpush.bf16.msra.mxu0 0
  %67 = vmatpush.bf16.msra.mxu0 0
  %68 = vmatpush.bf16.msra.mxu0 0
  %69 = vmatpush.bf16.msra.mxu0 %v56
  %70 = vmatmul.bf16.gmra.mxu0 %v60
  %v71 = vpop.f32.mrf.mxu0
  %v72 = vadd.f32 0.0, %v71
  %v73 = vpop.f32.mrf.mxu0
  %v74 = vadd.f32 0.0, %v73
  %75 = vdwg.mxu0
  %v76 = vadd.f32 %v43, %v72
  %v77 = vadd.f32 %v44, %v74
  %vm78 = vcmask 64512
  %79 = vst.msk [vmem:[#allocation2] sm:$0xff] %vm78, %v76
  %80 = vst.msk [vmem:[#allocation2 + $0x8] sm:$0xff] %vm78, %v77
  %v81 = vld [vmem:[#allocation3] sm:$0xff]
  %v82 = vld [vmem:[#allocation3 + $0x8] sm:$0xff]
  %v83 = vunpack.c.l.bf16 %v41
  %v84 = vunpack.c.l.bf16 %v42
  %v85 = vsel %vm58, %v83, 0.0
  %86 = vadd.xlane.f32.xlu0 %v85
  %v87 = vpop.xlane.xlu0 %86
  %v88 = vsel %vm58, %v84, 0.0
  %89 = vadd.xlane.f32.xlu0 %v88
  %v90 = vpop.xlane.xlu0 %89
  %v91 = vadd.f32 %v81, %v87
  %v92 = vadd.f32 %v82, %v90
  %vm93 = vcmask 7168
  %94 = vst.msk [vmem:[#allocation3] sm:$0xff] %vm93, %v91
  %95 = vst.msk [vmem:[#allocation3 + $0x8] sm:$0xff] %vm93, %v92
  // Predicated region
  $region34: #{gnn_forward.3} parent=0 // pred_check
    %p96 = pneg %p27
  $region35: #{gnn_forward.3} parent=0 // pred_check_branch
    %98 = sbr.rel (%p96) target = $region37
  $region36: #{gnn_forward.3} parent=0 // pred_region
    %v99 = vld [vmem:[#allocation3] sm:$0xff]
    %v100 = vld [vmem:[#allocation3 + $0x8] sm:$0xff]
    %v101 = vadd.f32 %v99, 1.0
    %v102 = vadd.f32 %v100, 1.0
    %v103 = vld [vmem:[#allocation2] sm:$0xff]
    %v104 = vld [vmem:[#allocation2 + $0x8] sm:$0xff]
    %v105 = vld [vmem:[%s3] sm:$0xff]
    %v106 = vld [vmem:[%s4] sm:$0x1]
    %108 = vset.pattern.permute.xlu0 0
    %109 = vperm.xlu0 %108, %v101
    %v110 = vpop.permute.xlu0 %109
    %113 = vset.pattern.permute.xlu0 0
    %114 = vperm.xlu0 %113, %v102
    %v115 = vpop.permute.xlu0 %114
    %v118 = vperm.slane %v106, 0
    %v120 = vmul.f32 %v110, %v118
    %v121 = vmul.f32 %v115, %v118
    %v123 = vsel %vm78, %v103, 0
    %v126 = vsel %vm78, %v104, 0
    %128 = vmatpush.msra.mxu0 0.0
    %129 = vmatpush.msra.mxu0 0.0
    %130 = vmatpush.msra.mxu0 0.0
    %131 = vmatpush.msra.mxu0 0.0
    %132 = vmatpush.msra.mxu0 0.0
    %133 = vmatpush.msra.mxu0 0.0
    %134 = vmatpush.msra.mxu0 0.0
    %135 = vmatpush.msra.mxu0 0.0
    %136 = vmatpush.msra.mxu0 0.0
    %137 = vmatpush.msra.mxu0 0.0
    %138 = vmatpush.msra.mxu0 0.0
    %139 = vmatpush.msra.mxu0 0.0
    %140 = vmatpush.msra.mxu0 0.0
    %141 = vmatpush.msra.mxu0 0.0
    %142 = vmatpush.msra.mxu0 0.0
    %143 = vmatpush.msra.mxu0 %v105
    %144 = vmatmul.f32.gmra.mxu0 %v123
    %v145 = vpop.f32.mrf.mxu0
    %v146 = vadd.f32 %v120, %v145
    %147 = vmatmul.f32.gmra.mxu0 %v126
    %v148 = vpop.f32.mrf.mxu0
    %v149 = vadd.f32 %v121, %v148
    %150 = vdwg.mxu0
    %v151 = vmax.f32 %v146, 0.0
    %v152 = vmax.f32 %v149, 0.0
    %v153 = vld [vmem:[%s5] sm:$0xff]
    %v154 = vld [vmem:[%s5 + $0x8] sm:$0xff]
    %v155 = vld [vmem:[%s5 + $0x10] sm:$0xff]
    %v156 = vld [vmem:[%s5 + $0x18] sm:$0xff]
    %v157 = vld [vmem:[%s6] sm:$0x1]
    %v159 = vperm.slane %v157, 0
    %vm161 = vcmask 261120
    %v163 = vsel %vm161, %v151, 0
    %v166 = vsel %vm161, %v152, 0
    %168 = vmatpush.msra.mxu0 0.0
    %169 = vmatpush.msra.mxu0 0.0
    %170 = vmatpush.msra.mxu0 0.0
    %171 = vmatpush.msra.mxu0 0.0
    %172 = vmatpush.msra.mxu0 0.0
    %173 = vmatpush.msra.mxu0 0.0
    %174 = vmatpush.msra.mxu0 0.0
    %175 = vmatpush.msra.mxu0 0.0
    %176 = vmatpush.msra.mxu0 0.0
    %177 = vmatpush.msra.mxu0 0.0
    %178 = vmatpush.msra.mxu0 0.0
    %179 = vmatpush.msra.mxu0 0.0
    %180 = vmatpush.msra.mxu0 %v156
    %181 = vmatpush.msra.mxu0 %v155
    %182 = vmatpush.msra.mxu0 %v154
    %183 = vmatpush.msra.mxu0 %v153
    %184 = vmatmul.f32.gmra.mxu0 %v163
    %v185 = vpop.f32.mrf.mxu0
    %v186 = vadd.f32 %v159, %v185
    %187 = vmatmul.f32.gmra.mxu0 %v166
    %v188 = vpop.f32.mrf.mxu0
    %v189 = vadd.f32 %v159, %v188
    %190 = vdwg.mxu0
    %v191 = vpack.c.bf16 %v186, %v186
    %v192 = vpack.c.bf16 %v189, %v189
    %vm193 = vcmask 257024
    %194 = vst.msk [vmem:[%s7] sm:$0xf] %vm193, %v191
    %195 = vst.msk [vmem:[%s7 + $0x4] sm:$0xf] %vm193, %v192
  $region37: #{gnn_forward.3} parent=0 // pred_fallthru
    _
  // Predicated region
  $region38: #{gnn_forward.3} parent=0 // pred_check
    _
  $region39: #{gnn_forward.3} parent=0 // pred_check_branch
    %197 = sbr.rel (0) target = $region41
  $region40: #{gnn_forward.3} parent=0 // pred_region
    _
  $region41: #{gnn_forward.3} parent=0 // pred_fallthru
    _
  // Predicated region
  $region42: #{gnn_forward.3} parent=0 // pred_check
    _
  $region43: #{gnn_forward.3} parent=0 // pred_check_branch
    %199 = sbr.rel (0) target = $region45
  $region44: #{gnn_forward.3} parent=0 // pred_region
    _
  $region45: #{gnn_forward.3} parent=0 // pred_fallthru
    _

</llo_original>
